<compile_context>
chip_gen: v6e
topology: v6e:2x2x1
jax: 0.10.0
libtpu: 0.0.40
codegen_flags: <defaults>
</compile_context>

<pallas_src>
import functools

import jax
import jax.numpy as jnp
from jax import lax
from jax.experimental import pallas as pl
from jax.experimental.pallas import tpu as pltpu

EPS = 1e-5

_MIN_GRID_STEPS = 4          # aim for >= 4 channel tiles (pipeline + megacore)
_MIN_BLOCK_BYTES = 512 * 1024  # but keep each block >= ~512 KiB


def _round_up(x, m):
    return -(-x // m) * m


def _vmem_budget():
    """(vmem_limit_bytes, per-tile block budget) for this TPU generation."""
    try:
        info = pltpu.get_tpu_info()
        cap = int(getattr(info, "vmem_capacity_bytes", 0)) or (64 << 20)
    except Exception:  # pragma: no cover - conservative (v7x-sized) fallback
        cap = 64 << 20
    limit = min((cap * 3) // 4, 64 << 20)   # 64 MiB on 128-MiB parts, 48 MiB on v7x
    budget = limit // 8                     # 2x(in) + 2x(out) + f32 temps headroom
    return limit, budget


def _pick_channel_tile(C, gran, padded_bytes_per_channel, budget):
    """Channel tile (multiple of `gran`, or == C when C <= gran).

    Returns (tc, fits_single_pass). Targets >= _MIN_GRID_STEPS grid steps with
    blocks >= _MIN_BLOCK_BYTES, capped by the per-tile VMEM budget.
    """
    if C <= gran:
        return C, (C * padded_bytes_per_channel <= budget)
    tc_budget = (budget // padded_bytes_per_channel) // gran * gran
    if tc_budget < gran:
        return gran, False  # even a minimal tile busts VMEM -> two-phase path
    tc_steps = _round_up(-(-C // _MIN_GRID_STEPS), gran)
    tc_floor = _round_up(max(1, _MIN_BLOCK_BYTES // padded_bytes_per_channel), gran)
    tc = min(tc_budget, max(tc_steps, tc_floor), _round_up(C, gran))
    return int(tc), True


def _cost_estimate(x):
    nbytes = x.size * x.dtype.itemsize
    return pl.CostEstimate(flops=7 * x.size,
                           transcendentals=x.shape[1],
                           bytes_accessed=2 * nbytes)


def _compiler_params(semantics, vmem_limit):
    return pltpu.CompilerParams(dimension_semantics=semantics,
                                vmem_limit_bytes=vmem_limit)


# ---------------------------------------------------------------------------
# Single-pass kernels (whole (N, ., L) row group per channel tile in VMEM)
# ---------------------------------------------------------------------------
def _bn_ncl_kernel(x_ref, o_ref):
    # x_ref: (N, tc, L). Per-channel stats over axes (0, 2). gamma=1, beta=0.
    shp = x_ref.shape
    inv_m = jnp.float32(1.0 / (shp[0] * shp[2]))
    # Batch-axis sums on the VPU first, one lane reduce (XLU) per tile.
    x = x_ref[...].astype(jnp.float32)
    mean = jnp.sum(jnp.sum(x, axis=0), axis=-1, keepdims=True) * inv_m      # (tc,1)
    c = x_ref[...].astype(jnp.float32) - mean
    var = jnp.sum(jnp.sum(c * c, axis=0), axis=-1, keepdims=True) * inv_m
    inv_std = lax.rsqrt(var + jnp.float32(EPS))
    o_ref[...] = ((x_ref[...].astype(jnp.float32) - mean) * inv_std).astype(o_ref.dtype)


def _bn_ncl_affine_kernel(x_ref, g_ref, b_ref, o_ref):
    # Parameterized variant: fused y = x * (inv_std*gamma) + (beta - mean*scale).
    shp = x_ref.shape
    inv_m = jnp.float32(1.0 / (shp[0] * shp[2]))
    x = x_ref[...].astype(jnp.float32)
    mean = jnp.sum(jnp.sum(x, axis=0), axis=-1, keepdims=True) * inv_m      # (tc,1)
    c = x_ref[...].astype(jnp.float32) - mean
    var = jnp.sum(jnp.sum(c * c, axis=0), axis=-1, keepdims=True) * inv_m
    inv_std = lax.rsqrt(var + jnp.float32(EPS))
    scale = inv_std * g_ref[...].astype(jnp.float32)                        # (tc,1)
    shift = b_ref[...].astype(jnp.float32) - mean * scale
    o_ref[...] = (x_ref[...].astype(jnp.float32) * scale + shift).astype(o_ref.dtype)


def _bn_nc_kernel(x_ref, o_ref):
    # x_ref: (N, tc). Channels on lanes, reduce over the batch (sublane) axis.
    inv_m = jnp.float32(1.0 / x_ref.shape[0])
    x = x_ref[...].astype(jnp.float32)
    mean = jnp.sum(x, axis=0, keepdims=True) * inv_m                        # (1,tc)
    c = x_ref[...].astype(jnp.float32) - mean
    var = jnp.sum(c * c, axis=0, keepdims=True) * inv_m
    inv_std = lax.rsqrt(var + jnp.float32(EPS))
    o_ref[...] = ((x_ref[...].astype(jnp.float32) - mean) * inv_std).astype(o_ref.dtype)


def _bn_nc_affine_kernel(x_ref, g_ref, b_ref, o_ref):
    inv_m = jnp.float32(1.0 / x_ref.shape[0])
    x = x_ref[...].astype(jnp.float32)
    mean = jnp.sum(x, axis=0, keepdims=True) * inv_m                        # (1,tc)
    c = x_ref[...].astype(jnp.float32) - mean
    var = jnp.sum(c * c, axis=0, keepdims=True) * inv_m
    inv_std = lax.rsqrt(var + jnp.float32(EPS))
    scale = inv_std * g_ref[...].astype(jnp.float32)
    shift = b_ref[...].astype(jnp.float32) - mean * scale
    o_ref[...] = (x_ref[...].astype(jnp.float32) * scale + shift).astype(o_ref.dtype)


# ---------------------------------------------------------------------------
# Two-phase kernels (stats pass + normalize pass) for rows too big for VMEM.
# Note: sum/sum-of-squares accumulation (f32) trades a little accuracy when
# |mean| >> std for a single extra streaming pass instead of VMEM spills.
# ---------------------------------------------------------------------------
def _stats3d_kernel(x_ref, s_ref, q_ref, *, n_total):
    n_idx = pl.program_id(1)

    @pl.when(n_idx == 0)
    def _():
        s_ref[...] = jnp.zeros_like(s_ref)
        q_ref[...] = jnp.zeros_like(q_ref)

    x = x_ref[...].astype(jnp.float32)                                      # (tn,tc,L)
    row = lax.broadcasted_iota(jnp.int32, x.shape, 0) + n_idx * x.shape[0]
    x = jnp.where(row < n_total, x, 0.0)   # mask padded batch rows (partial tile)
    s_ref[...] += jnp.sum(jnp.sum(x, axis=0), axis=-1, keepdims=True)       # (tc,1)
    q_ref[...] += jnp.sum(jnp.sum(x * x, axis=0), axis=-1, keepdims=True)


def _norm3d_kernel(x_ref, s_ref, q_ref, g_ref, b_ref, o_ref, *, inv_m):
    inv_m = jnp.float32(inv_m)
    mean = s_ref[...] * inv_m                                               # (tc,1)
    var = jnp.maximum(q_ref[...] * inv_m - mean * mean, 0.0)
    inv_std = lax.rsqrt(var + jnp.float32(EPS))
    scale = inv_std * g_ref[...]
    shift = b_ref[...] - mean * scale
    o_ref[...] = (x_ref[...].astype(jnp.float32) * scale + shift).astype(o_ref.dtype)


def _stats2d_kernel(x_ref, s_ref, q_ref, *, n_total):
    n_idx = pl.program_id(1)

    @pl.when(n_idx == 0)
    def _():
        s_ref[...] = jnp.zeros_like(s_ref)
        q_ref[...] = jnp.zeros_like(q_ref)

    x = x_ref[...].astype(jnp.float32)                                      # (tn,tc)
    row = lax.broadcasted_iota(jnp.int32, x.shape, 0) + n_idx * x.shape[0]
    x = jnp.where(row < n_total, x, 0.0)
    s_ref[...] += jnp.sum(x, axis=0, keepdims=True)                         # (1,tc)
    q_ref[...] += jnp.sum(x * x, axis=0, keepdims=True)


def _norm2d_kernel(x_ref, s_ref, q_ref, g_ref, b_ref, o_ref, *, inv_m):
    inv_m = jnp.float32(inv_m)
    mean = s_ref[...] * inv_m                                               # (1,tc)
    var = jnp.maximum(q_ref[...] * inv_m - mean * mean, 0.0)
    inv_std = lax.rsqrt(var + jnp.float32(EPS))
    scale = inv_std * g_ref[...]
    shift = b_ref[...] - mean * scale
    o_ref[...] = (x_ref[...].astype(jnp.float32) * scale + shift).astype(o_ref.dtype)


# ---------------------------------------------------------------------------
# Wrappers
# ---------------------------------------------------------------------------
def _affine_params(C, gamma, beta, shape):
    g = jnp.ones((C,), jnp.float32) if gamma is None else gamma
    b = jnp.zeros((C,), jnp.float32) if beta is None else beta
    return (g.reshape(shape).astype(jnp.float32),
            b.reshape(shape).astype(jnp.float32))


def _bn_3d_two_phase(x, gamma, beta, vmem_limit, budget, batch_tile):
    N, C, L = x.shape
    tc = C if C < 8 else 8
    l_pad_bytes = _round_up(L, 128) * 4
    tn = batch_tile if batch_tile is not None else max(
        1, budget // (max(tc, 8) * l_pad_bytes))
    tn = int(min(tn, N))
    grid = (pl.cdiv(C, tc), pl.cdiv(N, tn))

    x_spec = pl.BlockSpec((tn, tc, L), lambda c, n: (n, c, 0))
    s_spec = pl.BlockSpec((tc, 1), lambda c, n: (c, 0))

    s, q = pl.pallas_call(
        functools.partial(_stats3d_kernel, n_total=N),
        out_shape=(jax.ShapeDtypeStruct((C, 1), jnp.float32),
                   jax.ShapeDtypeStruct((C, 1), jnp.float32)),
        grid=grid,
        in_specs=[x_spec],
        out_specs=(s_spec, s_spec),
        compiler_params=_compiler_params(("parallel", "arbitrary"), vmem_limit),
        cost_estimate=pl.CostEstimate(flops=3 * x.size, transcendentals=0,
                                      bytes_accessed=x.size * x.dtype.itemsize),
    )(x)

    g, b = _affine_params(C, gamma, beta, (C, 1))
    return pl.pallas_call(
        functools.partial(_norm3d_kernel, inv_m=1.0 / (N * L)),
        out_shape=jax.ShapeDtypeStruct((N, C, L), x.dtype),
        grid=grid,
        in_specs=[x_spec, s_spec, s_spec, s_spec, s_spec],
        out_specs=x_spec,
        compiler_params=_compiler_params(("parallel", "parallel"), vmem_limit),
        cost_estimate=_cost_estimate(x),
    )(x, s, q, g, b)


def _bn_2d_two_phase(x, gamma, beta, vmem_limit, budget, batch_tile):
    N, C = x.shape
    tc = C if C < 128 else 128
    tc_pad_bytes = _round_up(tc, 128) * 4
    if batch_tile is not None:
        tn = int(batch_tile)
    else:
        tn = max(8, (budget // tc_pad_bytes) // 8 * 8)
    tn = N if tn >= N else tn
    grid = (pl.cdiv(C, tc), pl.cdiv(N, tn))

    x_spec = pl.BlockSpec((tn, tc), lambda c, n: (n, c))
    s_spec = pl.BlockSpec((1, tc), lambda c, n: (0, c))

    s, q = pl.pallas_call(
        functools.partial(_stats2d_kernel, n_total=N),
        out_shape=(jax.ShapeDtypeStruct((1, C), jnp.float32),
                   jax.ShapeDtypeStruct((1, C), jnp.float32)),
        grid=grid,
        in_specs=[x_spec],
        out_specs=(s_spec, s_spec),
        compiler_params=_compiler_params(("parallel", "arbitrary"), vmem_limit),
        cost_estimate=pl.CostEstimate(flops=3 * x.size, transcendentals=0,
                                      bytes_accessed=x.size * x.dtype.itemsize),
    )(x)

    g, b = _affine_params(C, gamma, beta, (1, C))
    return pl.pallas_call(
        functools.partial(_norm2d_kernel, inv_m=1.0 / N),
        out_shape=jax.ShapeDtypeStruct((N, C), x.dtype),
        grid=grid,
        in_specs=[x_spec, s_spec, s_spec, s_spec, s_spec],
        out_specs=x_spec,
        compiler_params=_compiler_params(("parallel", "parallel"), vmem_limit),
        cost_estimate=_cost_estimate(x),
    )(x, s, q, g, b)


def _bn_3d(x, gamma, beta, channel_tile, two_phase, batch_tile):
    N, C, L = x.shape
    vmem_limit, budget = _vmem_budget()
    # Padded (8,128)-layout VMEM bytes per channel of an (N, tc, L) f32 block.
    row_bytes = N * _round_up(L, 128) * 4
    tc, fits = _pick_channel_tile(C, 8, row_bytes, budget)
    if channel_tile is not None:
        tc, fits = int(channel_tile), True
    use_two_phase = two_phase if two_phase is not None else (not fits)
    if use_two_phase:
        return _bn_3d_two_phase(x, gamma, beta, vmem_limit, budget, batch_tile)

    grid = (pl.cdiv(C, tc),)
    x_spec = pl.BlockSpec((N, tc, L), lambda c: (0, c, 0))
    out_shape = jax.ShapeDtypeStruct((N, C, L), x.dtype)
    cp = _compiler_params(("parallel",), vmem_limit)
    ce = _cost_estimate(x)

    if gamma is None and beta is None:
        # Fresh-init path (gamma=1, beta=0): no affine inputs, no affine math.
        return pl.pallas_call(_bn_ncl_kernel, out_shape=out_shape, grid=grid,
                              in_specs=[x_spec], out_specs=x_spec,
                              compiler_params=cp, cost_estimate=ce)(x)

    g, b = _affine_params(C, gamma, beta, (C, 1))
    p_spec = pl.BlockSpec((tc, 1), lambda c: (c, 0))
    return pl.pallas_call(_bn_ncl_affine_kernel, out_shape=out_shape, grid=grid,
                          in_specs=[x_spec, p_spec, p_spec], out_specs=x_spec,
                          compiler_params=cp, cost_estimate=ce)(x, g, b)


def _bn_2d(x, gamma, beta, channel_tile, two_phase, batch_tile):
    N, C = x.shape
    vmem_limit, budget = _vmem_budget()
    # Padded (8,128)-layout VMEM bytes per channel of an (N, tc) f32 block.
    col_bytes = _round_up(N, 8) * 4
    tc, fits = _pick_channel_tile(C, 128, col_bytes, budget)
    if channel_tile is not None:
        tc, fits = int(channel_tile), True
    use_two_phase = two_phase if two_phase is not None else (not fits)
    if use_two_phase:
        return _bn_2d_two_phase(x, gamma, beta, vmem_limit, budget, batch_tile)

    grid = (pl.cdiv(C, tc),)
    x_spec = pl.BlockSpec((N, tc), lambda c: (0, c))
    out_shape = jax.ShapeDtypeStruct((N, C), x.dtype)
    cp = _compiler_params(("parallel",), vmem_limit)
    ce = _cost_estimate(x)

    if gamma is None and beta is None:
        return pl.pallas_call(_bn_nc_kernel, out_shape=out_shape, grid=grid,
                              in_specs=[x_spec], out_specs=x_spec,
                              compiler_params=cp, cost_estimate=ce)(x)

    g, b = _affine_params(C, gamma, beta, (1, C))
    p_spec = pl.BlockSpec((1, tc), lambda c: (0, c))
    return pl.pallas_call(_bn_nc_affine_kernel, out_shape=out_shape, grid=grid,
                          in_specs=[x_spec, p_spec, p_spec], out_specs=x_spec,
                          compiler_params=cp, cost_estimate=ce)(x, g, b)


def dynamic_batchnorm1d(x, gamma=None, beta=None, *, channel_tile=None,
                        two_phase=None, batch_tile=None):
    """Freshly-initialized, training-mode BatchNorm1d (DynamicBatchNorm1d).

    x: (N, C) or (N, C, L). gamma/beta default to the fresh-init values (1, 0),
    in which case the affine pass is skipped entirely. `channel_tile`,
    `two_phase` and `batch_tile` are tuning / test overrides (None = auto).
    """
    if x.ndim == 3:
        return _bn_3d(x, gamma, beta, channel_tile, two_phase, batch_tile)
    if x.ndim == 2:
        return _bn_2d(x, gamma, beta, channel_tile, two_phase, batch_tile)
    raise ValueError("BatchNorm1d expects (N, C) or (N, C, L) input")


# ---------------------------------------------------------------------------
# Reference + test
# ---------------------------------------------------------------------------
def _reference(x):
    axes = (0,) if x.ndim == 2 else (0, 2)
    mean = jnp.mean(x, axis=axes, keepdims=True)
    var = jnp.mean((x - mean) ** 2, axis=axes, keepdims=True)  # biased
    return (x - mean) / jnp.sqrt(var + EPS)


if __name__ == "__main__":
    key = jax.random.PRNGKey(0)
    k1, k2, k3, k4, k5, k6, k7 = jax.random.split(key, 7)

    # 3D (N, C, L) path — default fresh params (gamma=1, beta=0).
    N, C, L = 4, 8, 32
    x3 = jax.random.normal(k1, (N, C, L), dtype=jnp.float32)
    out3 = jax.block_until_ready(dynamic_batchnorm1d(x3))
    ref3 = _reference(x3)
    assert out3.shape == (N, C, L)
    assert jnp.allclose(out3, ref3, atol=1e-5, rtol=1e-5), "3D default mismatch"

    # 3D path with explicit gamma/beta (parameterized, fused affine).
    gamma = jax.random.normal(k2, (C,), dtype=jnp.float32)
    beta = jax.random.normal(k3, (C,), dtype=jnp.float32)
    out3a = jax.block_until_ready(dynamic_batchnorm1d(x3, gamma, beta))
    ref3a = ref3 * gamma[None, :, None] + beta[None, :, None]
    assert jnp.allclose(out3a, ref3a, atol=1e-4, rtol=1e-4), "3D affine mismatch"

    # 2D (N, C) path — channels on lanes, reduce over batch.
    x2 = jax.random.normal(k4, (16, 8), dtype=jnp.float32)
    out2 = jax.block_until_ready(dynamic_batchnorm1d(x2))
    ref2 = _reference(x2)
    assert out2.shape == (16, 8)
    assert jnp.allclose(out2, ref2, atol=1e-5, rtol=1e-5), "2D default mismatch"

    # Multi-tile channel grid (exercises the tiled "parallel" path).
    x3b = jax.random.normal(k5, (4, 24, 32), dtype=jnp.float32)
    out3b = jax.block_until_ready(dynamic_batchnorm1d(x3b, channel_tile=8))
    ref3b = _reference(x3b)
    assert jnp.allclose(out3b, ref3b, atol=1e-5, rtol=1e-5), "tiled mismatch"

    # Two-phase fallback, 3D (forced; batch_tile=4 exercises partial-tile masking).
    x3c = jax.random.normal(k6, (6, 8, 32), dtype=jnp.float32)
    out3c = jax.block_until_ready(
        dynamic_batchnorm1d(x3c, two_phase=True, batch_tile=4))
    ref3c = _reference(x3c)
    assert jnp.allclose(out3c, ref3c, atol=1e-4, rtol=1e-4), "3D two-phase mismatch"

    # Two-phase fallback, 2D (forced; partial batch tile masked).
    x2b = jax.random.normal(k7, (20, 8), dtype=jnp.float32)
    out2b = jax.block_until_ready(
        dynamic_batchnorm1d(x2b, two_phase=True, batch_tile=8))
    ref2b = _reference(x2b)
    assert jnp.allclose(out2b, ref2b, atol=1e-4, rtol=1e-4), "2D two-phase mismatch"

    print("KERNEL_OK")
</pallas_src>

<mosaic_0001>
module attributes {stable_mosaic.version = 11 : i64} {
  func.func @_bn_ncl_kernel(%arg0: i32, %arg1: memref<4x8x32xf32, #tpu.memory_space<vmem>>, %arg2: memref<4x8x32xf32, #tpu.memory_space<vmem>>) attributes {dimension_semantics = [#tpu.dimension_semantics<parallel>], iteration_bounds = array<i64: 1>, scalar_prefetch = 0 : i64, scratch_operands = 0 : i64, tpu.core_type = #tpu.core_type<tc>, window_params = [{transform_indices = @transform_0, window_bounds = array<i64: 4, 8, 32>}, {transform_indices = @transform_1, window_bounds = array<i64: 4, 8, 32>}]} {
    %c0 = arith.constant 0 : index
    %c0_0 = arith.constant 0 : index
    %c0_1 = arith.constant 0 : index
    %0 = vector.load %arg1[%c0, %c0_0, %c0_1] : memref<4x8x32xf32, #tpu.memory_space<vmem>>, vector<4x8x32xf32>
    %cst = arith.constant dense<0.000000e+00> : vector<8x32xf32>
    %1 = vector.multi_reduction <add>, %0, %cst [0] : vector<4x8x32xf32> to vector<8x32xf32>
    %cst_2 = arith.constant dense<0.000000e+00> : vector<8xf32>
    %2 = vector.multi_reduction <add>, %1, %cst_2 [1] : vector<8x32xf32> to vector<8xf32>
    %3 = vector.shape_cast %2 : vector<8xf32> to vector<8x1xf32>
    %cst_3 = arith.constant 7.812500e-03 : f32
    %4 = vector.broadcast %cst_3 : f32 to vector<8x1xf32>
    %5 = arith.mulf %3, %4 : vector<8x1xf32>
    %c0_4 = arith.constant 0 : index
    %c0_5 = arith.constant 0 : index
    %c0_6 = arith.constant 0 : index
    %6 = vector.load %arg1[%c0_4, %c0_5, %c0_6] : memref<4x8x32xf32, #tpu.memory_space<vmem>>, vector<4x8x32xf32>
    %7 = vector.shape_cast %5 : vector<8x1xf32> to vector<1x8x1xf32>
    %8 = vector.broadcast %7 : vector<1x8x1xf32> to vector<4x8x32xf32>
    %9 = arith.subf %6, %8 : vector<4x8x32xf32>
    %10 = arith.mulf %9, %9 : vector<4x8x32xf32>
    %cst_7 = arith.constant dense<0.000000e+00> : vector<8x32xf32>
    %11 = vector.multi_reduction <add>, %10, %cst_7 [0] : vector<4x8x32xf32> to vector<8x32xf32>
    %cst_8 = arith.constant dense<0.000000e+00> : vector<8xf32>
    %12 = vector.multi_reduction <add>, %11, %cst_8 [1] : vector<8x32xf32> to vector<8xf32>
    %13 = vector.shape_cast %12 : vector<8xf32> to vector<8x1xf32>
    %cst_9 = arith.constant 7.812500e-03 : f32
    %14 = vector.broadcast %cst_9 : f32 to vector<8x1xf32>
    %15 = arith.mulf %13, %14 : vector<8x1xf32>
    %cst_10 = arith.constant 9.99999974E-6 : f32
    %16 = vector.broadcast %cst_10 : f32 to vector<8x1xf32>
    %17 = arith.addf %15, %16 : vector<8x1xf32>
    %18 = math.rsqrt %17 : vector<8x1xf32>
    %c0_11 = arith.constant 0 : index
    %c0_12 = arith.constant 0 : index
    %c0_13 = arith.constant 0 : index
    %19 = vector.load %arg1[%c0_11, %c0_12, %c0_13] : memref<4x8x32xf32, #tpu.memory_space<vmem>>, vector<4x8x32xf32>
    %20 = vector.shape_cast %5 : vector<8x1xf32> to vector<1x8x1xf32>
    %21 = vector.broadcast %20 : vector<1x8x1xf32> to vector<4x8x32xf32>
    %22 = arith.subf %19, %21 : vector<4x8x32xf32>
    %23 = vector.shape_cast %18 : vector<8x1xf32> to vector<1x8x1xf32>
    %24 = vector.broadcast %23 : vector<1x8x1xf32> to vector<4x8x32xf32>
    %25 = arith.mulf %22, %24 : vector<4x8x32xf32>
    %c0_14 = arith.constant 0 : index
    %c0_15 = arith.constant 0 : index
    %c0_16 = arith.constant 0 : index
    %26 = vector.load %arg2[%c0_14, %c0_15, %c0_16] : memref<4x8x32xf32, #tpu.memory_space<vmem>>, vector<4x8x32xf32>
    tpu.vector_store %arg2[%c0_14, %c0_15, %c0_16], %25 {strides = array<i32>} : memref<4x8x32xf32, #tpu.memory_space<vmem>>, vector<4x8x32xf32>,
    return
  }
  func.func @transform_0(%arg0: i32) -> (i32, i32, i32) {
    %c0_i32 = arith.constant 0 : i32
    %c0_i32_0 = arith.constant 0 : i32
    %c0_i32_1 = arith.constant 0 : i32
    return %c0_i32, %arg0, %c0_i32_0 : i32, i32, i32
  }
  func.func @transform_1(%arg0: i32) -> (i32, i32, i32) {
    %c0_i32 = arith.constant 0 : i32
    %c0_i32_0 = arith.constant 0 : i32
    %c0_i32_1 = arith.constant 0 : i32
    return %c0_i32, %arg0, %c0_i32_0 : i32, i32, i32
  }
}

</mosaic_0001>

<llo_original>
// kernel: tpu_custom_call.1
$region0: #{tpu_custom_call.1}
  #allocation0 [shape = 'u32[]', space=smem, size = 0x4, offset = 0x4, fixed_abs, tag = 'smem constant byte address 0x4 - core index']
  #allocation1 [shape = 'u32[144,128]{1,0:T(1,128)}', space=vmem, size = 0x12000, scoped, tag = 'internal scratch']
  %s0 = inlined_call_operand.hbm [shape: f32[4,8,32], index: 0, kind: input, shape index: {}]
  %s1 = inlined_call_operand.hbm [shape: f32[4,8,32], index: 1, kind: output, shape index: {}]
  %s2 = sld [smem:[#allocation0]]
  $region18: #{tpu_custom_call.1} parent=0
    _
  %s4 = ssub.s32 1, %s2
  %s5 = scalar_select 0, %s4, %s2
  $region1: #{tpu_custom_call.1} parent=0
    #allocation2 [shape = 'u8[16384]{0}', space=vmem, size = 0x4000, scoped, tag = 'input window, operand 0, single buffered']
    #allocation3 [shape = 's32[1]{0}', space=sflag, size = 0x4, scoped, tag = 'scoped memory for tpu_custom_call.1']
    #allocation4 [shape = 's32[1]{0}', space=sflag, size = 0x4, scoped, tag = 'scoped memory for tpu_custom_call.1']
    #allocation5 [shape = 'u8[16384]{0}', space=vmem, size = 0x4000, scoped, tag = 'output window, operand 0, single buffered']
    %6 = vsyncpa [#allocation3], 0
    %7 = vsyncpa [#allocation4], 0
    // Predicated region
    $region2: #{tpu_custom_call.1} parent=1 // pred_check
      _
    $region3: #{tpu_custom_call.1} parent=1 // pred_check_branch
      %9 = sbr.rel (0) target = $region5
    $region4: #{tpu_custom_call.1} parent=1 // pred_region
      %s11 = ssub.s32 512, 512
      %12 = vsyncadd [#allocation3], %s11
      %s13 = sshll.u32 [#allocation2], 4
      %s14 = int_to_ptr.vmem [resolvable:$true] %s13
      %19 = dma.hbm_to_vmem [thread:$0]  %s0, 512, %s14, [#allocation3], 128, 128, 8
    $region5: #{tpu_custom_call.1} parent=1 // pred_fallthru
      _
    // Predicated region
    $region6: #{tpu_custom_call.1} parent=1 // pred_check
      _
    $region7: #{tpu_custom_call.1} parent=1 // pred_check_branch
      %21 = sbr.rel (0) target = $region9
    $region8: #{tpu_custom_call.1} parent=1 // pred_region
      %22 = dma.done [#allocation3], 512
    $region9: #{tpu_custom_call.1} parent=1 // pred_fallthru
      _
    %v23 = vld [vmem:[#allocation2] sm:$0xff]
    %v24 = vld [vmem:[#allocation2 + $0x8] sm:$0xff]
    %v25 = vld [vmem:[#allocation2 + $0x10] sm:$0xff]
    %v26 = vld [vmem:[#allocation2 + $0x18] sm:$0xff]
    %vm27 = vcmask 261120
    %v28 = vsel %vm27, %v23, 0.0
    %v29 = vsel %vm27, %v24, 0.0
    %v30 = vadd.f32 %v28, %v29
    %v31 = vsel %vm27, %v25, 0.0
    %v32 = vadd.f32 %v30, %v31
    %v33 = vsel %vm27, %v26, 0.0
    %v34 = vadd.f32 %v32, %v33
    %v35 = vsel %vm27, %v34, 0.0
    %36 = vadd.xlane.f32.xlu0 %v35
    %v37 = vpop.xlane.xlu0 %36
    %v38 = vmul.f32 %v37, 0.0078125
    %v39 = vsub.f32 %v23, %v38
    %v40 = vsub.f32 %v24, %v38
    %v41 = vsub.f32 %v25, %v38
    %v42 = vsub.f32 %v26, %v38
    %v43 = vmul.f32 %v39, %v39
    %v44 = vmul.f32 %v40, %v40
    %v45 = vmul.f32 %v41, %v41
    %v46 = vmul.f32 %v42, %v42
    %v47 = vsel %vm27, %v43, 0.0
    %v48 = vsel %vm27, %v44, 0.0
    %v49 = vadd.f32 %v47, %v48
    %v50 = vsel %vm27, %v45, 0.0
    %v51 = vadd.f32 %v49, %v50
    %v52 = vsel %vm27, %v46, 0.0
    %v53 = vadd.f32 %v51, %v52
    %v54 = vsel %vm27, %v53, 0.0
    %55 = vadd.xlane.f32.xlu0 %v54
    %v56 = vpop.xlane.xlu0 %55
    %v57 = vmul.f32 %v56, 0.0078125
    %v58 = vadd.f32 %v57, 1e-05
    %v59 = vrsqrt.pop %v58
    %v60 = vmul.f32 %v39, %v59
    %v61 = vmul.f32 %v40, %v59
    %v62 = vmul.f32 %v41, %v59
    %v63 = vmul.f32 %v42, %v59
    %64 = vst.msk [vmem:[#allocation5] sm:$0xff] %vm27, %v60
    %65 = vst.msk [vmem:[#allocation5 + $0x8] sm:$0xff] %vm27, %v61
    %66 = vst.msk [vmem:[#allocation5 + $0x10] sm:$0xff] %vm27, %v62
    %67 = vst.msk [vmem:[#allocation5 + $0x18] sm:$0xff] %vm27, %v63
    // Predicated region
    $region10: #{tpu_custom_call.1} parent=1 // pred_check
      _
    $region11: #{tpu_custom_call.1} parent=1 // pred_check_branch
      %69 = sbr.rel (0) target = $region13
    $region12: #{tpu_custom_call.1} parent=1 // pred_region
      %s71 = ssub.s32 512, 512
      %72 = vsyncadd [#allocation4], %s71
      %s73 = sshll.u32 [#allocation5], 4
      %s74 = int_to_ptr.vmem [resolvable:$true] %s73
      %79 = dma.vmem_to_hbm [thread:$0]  %s74, 512, %s1, [#allocation4], 128, 128, 8
    $region13: #{tpu_custom_call.1} parent=1 // pred_fallthru
      _
    // Predicated region
    $region14: #{tpu_custom_call.1} parent=1 // pred_check
      _
    $region15: #{tpu_custom_call.1} parent=1 // pred_check_branch
      %81 = sbr.rel (0) target = $region17
    $region16: #{tpu_custom_call.1} parent=1 // pred_region
      %82 = dma.done [#allocation4], 512
    $region17: #{tpu_custom_call.1} parent=1 // pred_fallthru
      _
    %83 = vsyncpa [#allocation3], 1
    %84 = vsyncpa [#allocation4], 1

</llo_original>
